<compile_context>
chip_gen: v7x
topology: tpu7x:2x2x1
jax: 0.10.0
libtpu: 0.0.40
codegen_flags: <defaults>
</compile_context>

<pallas_src>
import functools

import jax
import jax.numpy as jnp
from jax import lax
from jax.experimental import pallas as pl
from jax.experimental.pallas import tpu as pltpu

# Detectron2 (COCO R50-FPN) registered buffers, BGR order.
_D2_PIXEL_MEAN = (103.530, 116.280, 123.675)
_D2_PIXEL_STD = (57.375, 57.120, 58.395)

_VMEM_TILE_BUDGET = 24 * 1024 * 1024   # target working set for tile selection
_VMEM_LIMIT_BYTES = 48 * 1024 * 1024   # scoped VMEM limit (safe on v5e/v6e/v7x)
_GOLDEN32 = -1640531527                # 0x9E3779B9 as int32 (seed mixing)


def _round_up(v, m):
    return (v + m - 1) // m * m


def _kernel_rng_supported():
    """In-kernel hardware PRNG needs the Mosaic TPU backend; the CPU / generic
    interpret path has no lowering for prng_seed / stateful_normal."""
    try:
        on_tpu = jax.devices()[0].platform == "tpu"
    except Exception:  # no devices at all
        on_tpu = False
    return (on_tpu and hasattr(pltpu, "prng_seed")
            and hasattr(pltpu, "stateful_normal"))


def _pick_row_tile(h, h_pad, bytes_per_row):
    """Row tile: multiple of 8, divides h_pad, strictly larger than the row
    padding (so only the LAST tile overhangs the input rows), estimated
    double-buffered VMEM working set within budget; prefer tiles <= h."""
    pad = h_pad - h
    cands = [t for t in range(8, h_pad + 1, 8) if h_pad % t == 0 and t > pad]
    within = [t for t in cands if t * bytes_per_row <= _VMEM_TILE_BUDGET]
    pool = within or [min(cands)]
    le_h = [t for t in pool if t <= h]
    return max(le_h or pool)


# Kernel layout: NCHW, grid = (B, 3, H_pad // TH), all axes parallel (B*3*n_h
# independent blocks give the v7x megacore plenty of work to shard). Each grid
# step reads one (TH, W) input row-strip (BGR flip folded into the index_map)
# and writes one (TH, W_pad) output row-strip with a single full-width store.
def _gaussian_d2_kernel(*refs, noise_mode, sigma, clip_lo, clip_hi, scale, bias,
                        valid_h, valid_w, tile_h, out_w, mask_rows, seed):
    if noise_mode == "input":
        x_ref, noise_ref, o_ref = refs
    else:
        x_ref, o_ref = refs
        noise_ref = None

    c = pl.program_id(1)
    t = pl.program_id(2)

    x = x_ref[...].astype(jnp.float32)                  # (tile_h, valid_w)

    # --- GaussianAugmentationPyTorch (augmentation=False): x + sigma*N(0,1) ---
    if noise_mode == "rng":
        blk = (pl.program_id(0) * pl.num_programs(1) + c) * pl.num_programs(2) + t
        # Mix the block id with a large odd constant so per-block hardware
        # seeds are not consecutive (avoids correlated streams).
        pltpu.prng_seed(jnp.int32(seed), blk * jnp.int32(_GOLDEN32))
        x = x + sigma * pltpu.stateful_normal((tile_h, valid_w), jnp.float32)
    elif noise_mode == "input":
        x = x + sigma * noise_ref[...].astype(jnp.float32)
    if clip_lo is not None:
        x = jnp.clip(x, clip_lo, clip_hi)

    # --- Detectron2 normalization fused into one FMA per element:
    #     (255*x - mean[c]) / std[c]  ==  x * scale[c] + bias[c]
    # scale/bias are compile-time floats selected by the scalar channel id.
    scale_c = jnp.where(c == 0, scale[0], jnp.where(c == 1, scale[1], scale[2]))
    bias_c = jnp.where(c == 0, bias[0], jnp.where(c == 1, bias[1], bias[2]))
    y = x * scale_c + bias_c

    # Build the full padded-width tile in-register so the store below is a
    # single full-width (unmasked when out_w % 128 == 0) store.
    if out_w > valid_w:
        y = jnp.concatenate(
            [y, jnp.zeros((tile_h, out_w - valid_w), jnp.float32)], axis=1)

    if mask_rows:
        # tile_h > (H_pad - H) guarantees every row >= valid_h (bottom padding
        # and OOB garbage rows of the overhanging input block) lives in the
        # LAST row tile only; interior tiles take the unmasked fast path.
        last = pl.num_programs(2) - 1

        @pl.when(t == last)
        def _():
            rows = (lax.broadcasted_iota(jnp.int32, (tile_h, out_w), 0)
                    + t * tile_h)
            o_ref[...] = jnp.where(rows < valid_h, y, 0.0).astype(o_ref.dtype)

        @pl.when(t != last)
        def _():
            o_ref[...] = y.astype(o_ref.dtype)
    else:
        o_ref[...] = y.astype(o_ref.dtype)


def gaussian_detectron2_preprocess(
    x, pixel_mean=_D2_PIXEL_MEAN, pixel_std=_D2_PIXEL_STD, *,
    sigma=0.0, clip_values=(0.0, 1.0), size_divisibility=32,
    input_format="BGR", data_format="NHWC",
    noise=None, use_kernel_rng=None, seed=0,
    lane_align_width=True, out_dtype=jnp.float32, noise_dtype=jnp.float32):
    """Fused Gaussian-noise + Detectron2 input preprocessing.

    x: float image batch in [0, 1]; NHWC (module layout, transposed here) or
       NCHW (data_format="NCHW", skips the transpose entirely).
    noise: optional explicit N(0,1) array of shape (B, 3, H, W) (output-channel
       order; noise is i.i.d. so the pairing does not change the distribution).
       Used for bit-exact reference testing.
    use_kernel_rng: None -> auto (in-kernel hardware PRNG on a real TPU,
       explicit-noise fallback elsewhere); True/False to force.
    lane_align_width: also round the padded width up to a multiple of 128 so
       the dominant output stream is written with unmasked lane-dense stores
       (extra zero columns are benign for Detectron2, which already pads).
    out_dtype: set to jnp.bfloat16 if the downstream backbone accepts it to
       halve the largest HBM stream (math stays f32 in-register).
    Returns the normalized, BGR, zero-padded (B, 3, H_pad, W_pad) tensor that
    estimate_forward feeds to the backbone.
    """
    if data_format == "NHWC":
        B, H, W, C = x.shape
        assert C == 3
        x_nchw = jnp.transpose(x, (0, 3, 1, 2))
    else:
        B, C, H, W = x.shape
        assert C == 3
        x_nchw = x

    H_pad = _round_up(H, size_divisibility)
    W_pad = _round_up(W, size_divisibility)
    if lane_align_width:
        W_pad = _round_up(W_pad, 128)

    # --- noise source selection -------------------------------------------
    if sigma == 0.0:
        noise_mode = "none"
    elif noise is not None:
        assert noise.shape == (B, 3, H, W)
        noise_mode = "input"
    elif use_kernel_rng or (use_kernel_rng is None and _kernel_rng_supported()):
        noise_mode = "rng"
    else:
        noise_mode = "input"
        noise = jax.random.normal(jax.random.PRNGKey(seed), (B, 3, H, W),
                                  dtype=noise_dtype)

    # --- VMEM-aware row-tile selection --------------------------------------
    x_bytes = jnp.dtype(x_nchw.dtype).itemsize
    out_bytes = jnp.dtype(out_dtype).itemsize
    n_bytes = jnp.dtype(noise.dtype).itemsize if noise_mode == "input" else 0
    bytes_per_row = (2 * x_bytes * W          # x, double-buffered
                     + 2 * n_bytes * W        # noise, double-buffered
                     + 2 * out_bytes * W_pad  # output, double-buffered
                     + 3 * 4 * W_pad)         # in-register f32 temporaries
    TH = _pick_row_tile(H, H_pad, bytes_per_row)
    n_h = H_pad // TH
    mask_rows = (H % TH) != 0

    # --- compile-time constants (no scalar prefetch) -------------------------
    pixel_mean = tuple(float(v) for v in pixel_mean)
    pixel_std = tuple(float(v) for v in pixel_std)
    scale = tuple(255.0 / s for s in pixel_std)
    bias = tuple(-m / s for m, s in zip(pixel_mean, pixel_std))
    bgr = (input_format == "BGR")
    clip_lo = None if clip_values is None else float(clip_values[0])
    clip_hi = None if clip_values is None else float(clip_values[1])

    kernel = functools.partial(
        _gaussian_d2_kernel, noise_mode=noise_mode, sigma=float(sigma),
        clip_lo=clip_lo, clip_hi=clip_hi, scale=scale, bias=bias,
        valid_h=H, valid_w=W, tile_h=TH, out_w=W_pad,
        mask_rows=mask_rows, seed=int(seed))

    def x_map(b, c, t):
        return (b, (2 - c) if bgr else c, t, 0)   # fold RGB->BGR flip into DMA

    in_specs = [pl.BlockSpec((None, None, TH, W), x_map)]
    args = [x_nchw]
    if noise_mode == "input":
        in_specs.append(
            pl.BlockSpec((None, None, TH, W), lambda b, c, t: (b, c, t, 0)))
        args.append(noise)
    out_spec = pl.BlockSpec((None, None, TH, W_pad), lambda b, c, t: (b, c, t, 0))

    # Note: for very small tiles pipeline_mode=pl.Buffered(3) on the x spec can
    # hide exposed DMA latency; default double-buffering is kept here.
    return pl.pallas_call(
        kernel,
        out_shape=jax.ShapeDtypeStruct((B, 3, H_pad, W_pad), out_dtype),
        grid=(B, 3, n_h),
        in_specs=in_specs,
        out_specs=out_spec,
        compiler_params=pltpu.CompilerParams(
            dimension_semantics=("parallel", "parallel", "parallel"),
            vmem_limit_bytes=_VMEM_LIMIT_BYTES),
    )(*args)


def _reference(x_nhwc, noise_nchw, pixel_mean, pixel_std, sigma, clip_values,
               h_pad, w_pad, bgr=True):
    """Pure-JAX mirror of estimate_forward's preprocessing (given noise)."""
    x = jnp.transpose(x_nhwc, (0, 3, 1, 2)).astype(jnp.float32)
    if bgr:
        x = x[:, ::-1]
    if noise_nchw is not None and sigma != 0.0:
        x = x + sigma * noise_nchw.astype(jnp.float32)
    if clip_values is not None:
        x = jnp.clip(x, clip_values[0], clip_values[1])
    y = 255.0 * x
    mean = jnp.asarray(pixel_mean, jnp.float32)[None, :, None, None]
    std = jnp.asarray(pixel_std, jnp.float32)[None, :, None, None]
    y = (y - mean) / std
    H, W = x_nhwc.shape[1], x_nhwc.shape[2]
    return jnp.pad(y, ((0, 0), (0, 0), (0, h_pad - H), (0, w_pad - W)))


if __name__ == "__main__":
    key = jax.random.PRNGKey(0)
    kx, kn = jax.random.split(key)

    B, H, W = 2, 24, 40        # non-multiples of 32 -> exercises row & col padding
    sigma = 0.1
    clip_values = (0.0, 1.0)

    x = jax.random.uniform(kx, (B, H, W, 3), dtype=jnp.float32)       # [0,1] NHWC
    noise = jax.random.normal(kn, (B, 3, H, W), dtype=jnp.float32)    # N(0,1) NCHW

    pixel_mean = _D2_PIXEL_MEAN
    pixel_std = _D2_PIXEL_STD

    # 1) Explicit-noise path: exact check against the pure-JAX reference.
    out = gaussian_detectron2_preprocess(
        x, pixel_mean, pixel_std, sigma=sigma, clip_values=clip_values,
        size_divisibility=32, noise=noise)
    out = jax.block_until_ready(out)
    assert out.shape == (B, 3, 32, 128), out.shape
    ref = _reference(x, noise, pixel_mean, pixel_std, sigma, clip_values, 32, 128)
    assert float(jnp.max(jnp.abs(out - ref))) < 1e-4

    # 2) sigma = 0: pure Detectron2 preprocessing, no noise stream at all.
    out0 = gaussian_detectron2_preprocess(
        x, pixel_mean, pixel_std, sigma=0.0, clip_values=clip_values,
        size_divisibility=32)
    out0 = jax.block_until_ready(out0)
    ref0 = _reference(x, None, pixel_mean, pixel_std, 0.0, clip_values, 32, 128)
    assert float(jnp.max(jnp.abs(out0 - ref0))) < 1e-4

    # 3) Default (auto) noise path: in-kernel hardware PRNG on a real TPU,
    #    portable explicit-noise fallback on hosts without Mosaic lowering.
    try:
        out_rng = gaussian_detectron2_preprocess(
            x, pixel_mean, pixel_std, sigma=sigma, clip_values=clip_values,
            size_divisibility=32, seed=1234)
        out_rng = jax.block_until_ready(out_rng)
    except Exception:
        out_rng = gaussian_detectron2_preprocess(
            x, pixel_mean, pixel_std, sigma=sigma, clip_values=clip_values,
            size_divisibility=32, seed=1234, use_kernel_rng=False)
        out_rng = jax.block_until_ready(out_rng)
    assert out_rng.shape == (B, 3, 32, 128), out_rng.shape
    assert bool(jnp.all(jnp.isfinite(out_rng)))
    # Pad strips must be exactly zero.
    assert bool(jnp.all(out_rng[:, :, H:, :] == 0.0))
    assert bool(jnp.all(out_rng[:, :, :, W:] == 0.0))
    # De-normalized valid region must correspond to clipped pixels in [0, 255].
    std_b = jnp.asarray(pixel_std, jnp.float32)[None, :, None, None]
    mean_b = jnp.asarray(pixel_mean, jnp.float32)[None, :, None, None]
    denorm = out_rng[:, :, :H, :W] * std_b + mean_b
    assert float(denorm.min()) > -1e-2 and float(denorm.max()) < 255.0 + 1e-2

    print("KERNEL_OK")
</pallas_src>

<mosaic_0001>
module attributes {stable_mosaic.version = 11 : i64} {
  func.func @_gaussian_d2_kernel(%arg0: i32, %arg1: i32, %arg2: i32, %arg3: memref<1x1x16x40xf32, #tpu.memory_space<vmem>>, %arg4: memref<1x1x16x40xf32, #tpu.memory_space<vmem>>, %arg5: memref<1x1x16x128xf32, #tpu.memory_space<vmem>>) attributes {dimension_semantics = [#tpu.dimension_semantics<parallel>, #tpu.dimension_semantics<parallel>, #tpu.dimension_semantics<parallel>], iteration_bounds = array<i64: 2, 3, 2>, scalar_prefetch = 0 : i64, scratch_operands = 0 : i64, tpu.core_type = #tpu.core_type<tc>, window_params = [{transform_indices = @transform_0, window_bounds = array<i64: 1, 1, 16, 40>}, {transform_indices = @transform_1, window_bounds = array<i64: 1, 1, 16, 40>}, {transform_indices = @transform_2, window_bounds = array<i64: 1, 1, 16, 128>}]} {
    %c0 = arith.constant 0 : index
    %c0_0 = arith.constant 0 : index
    %c0_1 = arith.constant 0 : index
    %c0_2 = arith.constant 0 : index
    %0 = vector.load %arg3[%c0, %c0_0, %c0_1, %c0_2] : memref<1x1x16x40xf32, #tpu.memory_space<vmem>>, vector<1x1x16x40xf32>
    %1 = vector.shape_cast %0 : vector<1x1x16x40xf32> to vector<16x40xf32>
    %c0_3 = arith.constant 0 : index
    %c0_4 = arith.constant 0 : index
    %c0_5 = arith.constant 0 : index
    %c0_6 = arith.constant 0 : index
    %2 = vector.load %arg4[%c0_3, %c0_4, %c0_5, %c0_6] : memref<1x1x16x40xf32, #tpu.memory_space<vmem>>, vector<1x1x16x40xf32>
    %3 = vector.shape_cast %2 : vector<1x1x16x40xf32> to vector<16x40xf32>
    %cst = arith.constant 1.000000e-01 : f32
    %4 = vector.broadcast %cst : f32 to vector<16x40xf32>
    %5 = arith.mulf %4, %3 : vector<16x40xf32>
    %6 = arith.addf %1, %5 : vector<16x40xf32>
    %cst_7 = arith.constant 0.000000e+00 : f32
    %cst_8 = arith.constant 1.000000e+00 : f32
    %7 = vector.broadcast %cst_7 : f32 to vector<16x40xf32>
    %8 = arith.maximumf %7, %6 : vector<16x40xf32>
    %9 = vector.broadcast %cst_8 : f32 to vector<16x40xf32>
    %10 = arith.minimumf %9, %8 : vector<16x40xf32>
    %c0_i32 = arith.constant 0 : i32
    %11 = arith.cmpi eq, %arg1, %c0_i32 : i32
    %c1_i32 = arith.constant 1 : i32
    %12 = arith.cmpi eq, %arg1, %c1_i32 : i32
    %cst_9 = arith.constant 4.46428585 : f32
    %cst_10 = arith.constant 4.36681223 : f32
    %13 = arith.select %12, %cst_9, %cst_10 : f32
    %cst_11 = arith.constant 4.44444466 : f32
    %14 = arith.select %11, %cst_11, %13 : f32
    %c0_i32_12 = arith.constant 0 : i32
    %15 = arith.cmpi eq, %arg1, %c0_i32_12 : i32
    %c1_i32_13 = arith.constant 1 : i32
    %16 = arith.cmpi eq, %arg1, %c1_i32_13 : i32
    %cst_14 = arith.constant -2.03571439 : f32
    %cst_15 = arith.constant -2.11790395 : f32
    %17 = arith.select %16, %cst_14, %cst_15 : f32
    %cst_16 = arith.constant -1.80444443 : f32
    %18 = arith.select %15, %cst_16, %17 : f32
    %19 = vector.broadcast %14 : f32 to vector<16x40xf32>
    %20 = arith.mulf %10, %19 : vector<16x40xf32>
    %21 = vector.broadcast %18 : f32 to vector<16x40xf32>
    %22 = arith.addf %20, %21 : vector<16x40xf32>
    %cst_17 = arith.constant 0.000000e+00 : f32
    %23 = vector.broadcast %cst_17 : f32 to vector<16x88xf32>
    %24 = tpu.concatenate %22, %23 in 1 : vector<16x40xf32>, vector<16x88xf32> -> vector<16x128xf32>
    %c1_i32_18 = arith.constant 1 : i32
    %25 = arith.cmpi eq, %arg2, %c1_i32_18 : i32
    %26 = arith.extui %25 : i1 to i32
    %c0_i32_19 = arith.constant 0 : i32
    %27 = arith.cmpi ne, %26, %c0_i32_19 : i32
    scf.if %27 {
      %31 = tpu.iota {dimensions = array<i32: 0>} : vector<16x128xi32>
      %c16_i32 = arith.constant 16 : i32
      %32 = arith.muli %arg2, %c16_i32 : i32
      %33 = vector.broadcast %32 : i32 to vector<16x128xi32>
      %34 = arith.addi %31, %33 : vector<16x128xi32>
      %c24_i32 = arith.constant 24 : i32
      %35 = vector.broadcast %c24_i32 : i32 to vector<16x128xi32>
      %36 = arith.cmpi slt, %34, %35 : vector<16x128xi32>
      %cst_22 = arith.constant 0.000000e+00 : f32
      %37 = vector.broadcast %cst_22 : f32 to vector<16x128xf32>
      %38 = arith.select %36, %24, %37 : vector<16x128xi1>, vector<16x128xf32>
      %c0_23 = arith.constant 0 : index
      %c0_24 = arith.constant 0 : index
      %c0_25 = arith.constant 0 : index
      %c0_26 = arith.constant 0 : index
      %39 = vector.load %arg5[%c0_23, %c0_24, %c0_25, %c0_26] : memref<1x1x16x128xf32, #tpu.memory_space<vmem>>, vector<1x1x16x128xf32>
      %40 = vector.shape_cast %39 : vector<1x1x16x128xf32> to vector<16x128xf32>
      %41 = vector.shape_cast %38 : vector<16x128xf32> to vector<1x1x16x128xf32>
      tpu.vector_store %arg5[%c0_23, %c0_24, %c0_25, %c0_26], %41 {strides = array<i32>} : memref<1x1x16x128xf32, #tpu.memory_space<vmem>>, vector<1x1x16x128xf32>,
    } else {
    }
    %c1_i32_20 = arith.constant 1 : i32
    %28 = arith.cmpi ne, %arg2, %c1_i32_20 : i32
    %29 = arith.extui %28 : i1 to i32
    %c0_i32_21 = arith.constant 0 : i32
    %30 = arith.cmpi ne, %29, %c0_i32_21 : i32
    scf.if %30 {
      %c0_22 = arith.constant 0 : index
      %c0_23 = arith.constant 0 : index
      %c0_24 = arith.constant 0 : index
      %c0_25 = arith.constant 0 : index
      %31 = vector.load %arg5[%c0_22, %c0_23, %c0_24, %c0_25] : memref<1x1x16x128xf32, #tpu.memory_space<vmem>>, vector<1x1x16x128xf32>
      %32 = vector.shape_cast %31 : vector<1x1x16x128xf32> to vector<16x128xf32>
      %33 = vector.shape_cast %24 : vector<16x128xf32> to vector<1x1x16x128xf32>
      tpu.vector_store %arg5[%c0_22, %c0_23, %c0_24, %c0_25], %33 {strides = array<i32>} : memref<1x1x16x128xf32, #tpu.memory_space<vmem>>, vector<1x1x16x128xf32>,
    } else {
    }
    return
  }
  func.func @transform_0(%arg0: i32, %arg1: i32, %arg2: i32) -> (i32, i32, i32, i32) {
    %c2_i32 = arith.constant 2 : i32
    %0 = arith.subi %c2_i32, %arg1 : i32
    %c0_i32 = arith.constant 0 : i32
    %c0_i32_0 = arith.constant 0 : i32
    return %arg0, %0, %arg2, %c0_i32 : i32, i32, i32, i32
  }
  func.func @transform_1(%arg0: i32, %arg1: i32, %arg2: i32) -> (i32, i32, i32, i32) {
    %c0_i32 = arith.constant 0 : i32
    %c0_i32_0 = arith.constant 0 : i32
    return %arg0, %arg1, %arg2, %c0_i32 : i32, i32, i32, i32
  }
  func.func @transform_2(%arg0: i32, %arg1: i32, %arg2: i32) -> (i32, i32, i32, i32) {
    %c0_i32 = arith.constant 0 : i32
    %c0_i32_0 = arith.constant 0 : i32
    return %arg0, %arg1, %arg2, %c0_i32 : i32, i32, i32, i32
  }
}

</mosaic_0001>

<llo_original>
// kernel: tpu_custom_call.1
$region0: #{tpu_custom_call.1}
  #allocation0 [shape = 'u32[]', space=smem, size = 0x4, offset = 0x4, fixed_abs, tag = 'smem constant byte address 0x4 - core index']
  #allocation1 [shape = 'u32[144,128]{1,0:T(1,128)}', space=vmem, size = 0x12000, scoped, tag = 'internal scratch']
  %s0 = inlined_call_operand.hbm [shape: f32[2,3,24,40], index: 0, kind: input, shape index: {}]
  %s1 = inlined_call_operand.hbm [shape: f32[2,3,24,40], index: 1, kind: input, shape index: {}]
  %s2 = inlined_call_operand.hbm [shape: f32[2,3,32,128], index: 2, kind: output, shape index: {}]
  %s3 = sld [smem:[#allocation0]]
  $region57: #{tpu_custom_call.1} parent=0
    _
  %s5 = ssub.s32 1, %s3
  %s6 = scalar_select 0, %s5, %s3
  $region1: #{tpu_custom_call.1} parent=0
    #allocation2 [shape = 'u8[16384]{0}', space=vmem, size = 0x4000, scoped, tag = 'input window, operand 0']
    #allocation3 [shape = 's32[2]{0}', space=sflag, size = 0x8, scoped, tag = 'scoped memory for tpu_custom_call.1']
    #allocation4 [shape = 's32[2]{0}', space=sflag, size = 0x8, scoped, tag = 'scoped memory for tpu_custom_call.1']
    #allocation5 [shape = 'u8[16384]{0}', space=vmem, size = 0x4000, scoped, tag = 'input window, operand 1']
    #allocation6 [shape = 's32[2]{0}', space=sflag, size = 0x8, scoped, tag = 'scoped memory for tpu_custom_call.1']
    #allocation7 [shape = 'u8[16384]{0}', space=vmem, size = 0x4000, scoped, tag = 'output window, operand 0']
    %7 = vsyncpa [#allocation3], 0
    %s8 = scalar_lea.sflag [#allocation3], 1
    %9 = vsyncpa %s8, 0
    %10 = vsyncpa [#allocation6], 0
    %s11 = scalar_lea.sflag [#allocation6], 1
    %12 = vsyncpa %s11, 0
    %13 = vsyncpa [#allocation4], 0
    %s14 = scalar_lea.sflag [#allocation4], 1
    %15 = vsyncpa %s14, 0
    loop: start=0, step=1, limit=14
    $region2: #{tpu_custom_call.1} parent=1 // loop_pre_header
      _
    $region3: #{tpu_custom_call.1} parent=1 // loop_header
      %s17 = sphi 0, %s21
      %p18 = scmp.ge.s32.totalorder %s17, 14
      %s24 = sphi 0, %s43
      %s25 = sphi 0, %s39
      %s26 = sphi 0, %s35
      %s27 = sphi 0, %s24
      %s28 = sphi 0, %s25
      %s29 = sphi 0, %s26
      %s30 = sphi 0, %s27
      %s31 = sphi 0, %s28
      %s32 = sphi 0, %s29
      %s52 = sphi 0, %s54
      %s55 = sphi 0, %s52
      %s56 = sphi 0, %s55
      %s72 = sphi 0, %s56
      %s82 = sphi 0, %s84
      %s85 = sphi 0, %s82
      %s86 = sphi 0, %s85
      %s102 = sphi 0, %s86
      %s112 = sphi 0, %s114
      %s115 = sphi 0, %s112
      %s116 = sphi 0, %s115
      %s132 = sphi 0, %s116
    $region4: #{tpu_custom_call.1} parent=1 // loop_header_branch
      %20 = sbr.rel (%p18) target = $region8
    $region5: #{tpu_custom_call.1} parent=1 // loop_body
      %s22 = ssub.s32 %s17, 1
      %s23 = ssub.s32 %s17, 2
      %s33 = sadd.s32 1, %s26
      %p34 = scmp.ge.s32.totalorder %s33, 2
      %s35 = scalar_select %p34, 0, %s33
      %s36 = sadd.s32 1, %s25
      %s37 = scalar_select %p34, %s36, %s25
      %p38 = scmp.ge.s32.totalorder %s37, 3
      %s39 = scalar_select %p38, 0, %s37
      %s40 = sadd.s32 1, %s24
      %s41 = scalar_select %p38, %s40, %s24
      %p42 = scmp.ge.s32.totalorder %s41, 2
      %s43 = scalar_select %p42, 0, %s41
      %s44 = ssub.s32 2, %s25
      %s45 = ssub.s32 2, %s39
      %s46 = ssub.s32 %s24, %s43
      %s47 = ssub.s32 %s44, %s45
      %s48 = sor.u32 %s46, %s47
      %s49 = ssub.s32 %s26, %s35
      %s50 = sor.u32 %s48, %s49
      %p51 = scmp.eq.s32.totalorder %s50, 0
      %s53 = sadd.s32 %s52, 1
      %s54 = scalar_select %p51, %s52, %s53
      %p57 = pneg %p51
      %p58 = scmp.eq.s32.totalorder %s17, 11
      %p59 = por %p57, %p58
      %p60 = scmp.ne.s32.totalorder %s52, %s55
      %p61 = scmp.eq.s32.totalorder %s17, 0
      %p62 = por %p60, %p61
      %p63 = scmp.ne.s32.totalorder %s52, %s55
      %p64 = scmp.eq.s32.totalorder %s22, 11
      %p65 = por %p63, %p64
      %p66 = scmp.ne.s32.totalorder %s55, %s56
      %p67 = scmp.eq.s32.totalorder %s22, 0
      %p68 = por %p66, %p67
      %p69 = scmp.ne.s32.totalorder %s55, %s56
      %p70 = scmp.eq.s32.totalorder %s23, 11
      %p71 = por %p69, %p70
      %p73 = scmp.ne.s32.totalorder %s56, %s72
      %p74 = scmp.eq.s32.totalorder %s23, 0
      %p75 = por %p73, %p74
      %s76 = ssub.s32 %s24, %s43
      %s77 = ssub.s32 %s25, %s39
      %s78 = sor.u32 %s76, %s77
      %s79 = ssub.s32 %s26, %s35
      %s80 = sor.u32 %s78, %s79
      %p81 = scmp.eq.s32.totalorder %s80, 0
      %s83 = sadd.s32 %s82, 1
      %s84 = scalar_select %p81, %s82, %s83
      %p87 = pneg %p81
      %p88 = scmp.eq.s32.totalorder %s17, 11
      %p89 = por %p87, %p88
      %p90 = scmp.ne.s32.totalorder %s82, %s85
      %p91 = scmp.eq.s32.totalorder %s17, 0
      %p92 = por %p90, %p91
      %p93 = scmp.ne.s32.totalorder %s82, %s85
      %p94 = scmp.eq.s32.totalorder %s22, 11
      %p95 = por %p93, %p94
      %p96 = scmp.ne.s32.totalorder %s85, %s86
      %p97 = scmp.eq.s32.totalorder %s22, 0
      %p98 = por %p96, %p97
      %p99 = scmp.ne.s32.totalorder %s85, %s86
      %p100 = scmp.eq.s32.totalorder %s23, 11
      %p101 = por %p99, %p100
      %p103 = scmp.ne.s32.totalorder %s86, %s102
      %p104 = scmp.eq.s32.totalorder %s23, 0
      %p105 = por %p103, %p104
      %s106 = ssub.s32 %s24, %s43
      %s107 = ssub.s32 %s25, %s39
      %s108 = sor.u32 %s106, %s107
      %s109 = ssub.s32 %s26, %s35
      %s110 = sor.u32 %s108, %s109
      %p111 = scmp.eq.s32.totalorder %s110, 0
      %s113 = sadd.s32 %s112, 1
      %s114 = scalar_select %p111, %s112, %s113
      %p117 = pneg %p111
      %p118 = scmp.eq.s32.totalorder %s17, 11
      %p119 = por %p117, %p118
      %p120 = scmp.ne.s32.totalorder %s112, %s115
      %p121 = scmp.eq.s32.totalorder %s17, 0
      %p122 = por %p120, %p121
      %p123 = scmp.ne.s32.totalorder %s112, %s115
      %p124 = scmp.eq.s32.totalorder %s22, 11
      %p125 = por %p123, %p124
      %p126 = scmp.ne.s32.totalorder %s115, %s116
      %p127 = scmp.eq.s32.totalorder %s22, 0
      %p128 = por %p126, %p127
      %p129 = scmp.ne.s32.totalorder %s115, %s116
      %p130 = scmp.eq.s32.totalorder %s23, 11
      %p131 = por %p129, %p130
      %p133 = scmp.ne.s32.totalorder %s116, %s132
      %p134 = scmp.eq.s32.totalorder %s23, 0
      %p135 = por %p133, %p134
      %p136 = scmp.le.s32.totalorder 1, %s17
      %p137 = scmp.lt.s32.totalorder %s17, 13
      %p138 = pnand %p136, %p137
      %p139 = pneg %p138
      // Predicated region
      $region9: #{tpu_custom_call.1} parent=5 // pred_check
        _
      $region10: #{tpu_custom_call.1} parent=5 // pred_check_branch
        %141 = sbr.rel (%p138) target = $region12
      $region11: #{tpu_custom_call.1} parent=5 // pred_region
        %s142 = ssub.s32 %s17, 1
      $region12: #{tpu_custom_call.1} parent=5 // pred_fallthru
        _
      %p143 = scmp.lt.s32.totalorder %s17, 12
      // Predicated region
      $region13: #{tpu_custom_call.1} parent=5 // pred_check
        %p144 = pneg %p143
      $region14: #{tpu_custom_call.1} parent=5 // pred_check_branch
        %146 = sbr.rel (%p144) target = $region16
      $region15: #{tpu_custom_call.1} parent=5 // pred_region
        // Predicated region
        $region17: #{tpu_custom_call.1} parent=15 // pred_check
          %p147 = pneg %p62
        $region18: #{tpu_custom_call.1} parent=15 // pred_check_branch
          %149 = sbr.rel (%p147) target = $region20
        $region19: #{tpu_custom_call.1} parent=15 // pred_region
          %s150 = sand.u32 %s52, 1
          %s151 = scalar_lea.sflag [#allocation3], %s150
          %s152 = sand.u32 %s52, 1
          %s153 = smul.addr %s152, 16
          %s154 = scalar_lea.vmem [#allocation2], %s153
          %s155 = ssub.s32 2, %s25
          %s156 = smul.u32 2, %s26
          %s157 = ssub.s32 3, %s156
          %p158 = scmp.lt.s32.totalorder %s157, 2
          %s159 = scalar_select %p158, %s157, 2
          %s160 = smul.u32 128, %s159
          %s162 = ssub.s32 256, %s160
          %163 = vsyncadd %s151, %s162
          %p164 = scmp.ne.s32.totalorder 0, %s160
          %s165 = smul.addr %s155, 3
          %s166 = sadd.s32 %s156, %s165
          %s167 = smul.addr %s24, 9
          %s168 = sadd.s32 %s166, %s167
          %s169 = smul.addr %s168, 128
          %s170 = scalar_lea.hbm %s0, %s169
          %s171 = smul.u32 8, %s159
          %s172 = sshll.u32 %s154, 4
          %s173 = int_to_ptr.vmem [resolvable:$true] %s172
          %s174 = sshll.u32 %s171, 4
          %178 = dma.hbm_to_vmem [thread:$0]  (%p164), %s170, %s174, %s173, %s151, 128, 128, 8
        $region20: #{tpu_custom_call.1} parent=15 // pred_fallthru
          _
        // Predicated region
        $region21: #{tpu_custom_call.1} parent=15 // pred_check
          %p179 = pneg %p92
        $region22: #{tpu_custom_call.1} parent=15 // pred_check_branch
          %181 = sbr.rel (%p179) target = $region24
        $region23: #{tpu_custom_call.1} parent=15 // pred_region
          %s182 = sand.u32 %s82, 1
          %s183 = scalar_lea.sflag [#allocation6], %s182
          %s184 = sand.u32 %s82, 1
          %s185 = smul.addr %s184, 16
          %s186 = scalar_lea.vmem [#allocation5], %s185
          %s187 = smul.u32 2, %s26
          %s188 = ssub.s32 3, %s187
          %p189 = scmp.lt.s32.totalorder %s188, 2
          %s190 = scalar_select %p189, %s188, 2
          %s191 = smul.u32 128, %s190
          %s193 = ssub.s32 256, %s191
          %194 = vsyncadd %s183, %s193
          %p195 = scmp.ne.s32.totalorder 0, %s191
          %s196 = smul.addr %s25, 3
          %s197 = sadd.s32 %s187, %s196
          %s198 = smul.addr %s24, 9
          %s199 = sadd.s32 %s197, %s198
          %s200 = smul.addr %s199, 128
          %s201 = scalar_lea.hbm %s1, %s200
          %s202 = smul.u32 8, %s190
          %s203 = sshll.u32 %s186, 4
          %s204 = int_to_ptr.vmem [resolvable:$true] %s203
          %s205 = sshll.u32 %s202, 4
          %209 = dma.hbm_to_vmem [thread:$0]  (%p195), %s201, %s205, %s204, %s183, 128, 128, 8
        $region24: #{tpu_custom_call.1} parent=15 // pred_fallthru
          _
      $region16: #{tpu_custom_call.1} parent=5 // pred_fallthru
        _
      %p210 = scmp.le.s32.totalorder 1, %s17
      %p211 = scmp.lt.s32.totalorder %s17, 13
      %p212 = pnand %p210, %p211
      %p213 = pneg %p212
      // Predicated region
      $region25: #{tpu_custom_call.1} parent=5 // pred_check
        _
      $region26: #{tpu_custom_call.1} parent=5 // pred_check_branch
        %215 = sbr.rel (%p212) target = $region28
      $region27: #{tpu_custom_call.1} parent=5 // pred_region
        %s216 = ssub.s32 %s17, 1
        %s217 = sand.u32 %s55, 1
        %s218 = scalar_lea.sflag [#allocation3], %s217
        %s219 = sand.u32 %s55, 1
        %s220 = smul.addr %s219, 16
        %s221 = scalar_lea.vmem [#allocation2], %s220
        // Predicated region
        $region29: #{tpu_custom_call.1} parent=27 // pred_check
          %p222 = pneg %p68
        $region30: #{tpu_custom_call.1} parent=27 // pred_check_branch
          %224 = sbr.rel (%p222) target = $region32
        $region31: #{tpu_custom_call.1} parent=27 // pred_region
          %225 = dma.done %s218, 256
        $region32: #{tpu_custom_call.1} parent=27 // pred_fallthru
          _
        %s226 = sand.u32 %s85, 1
        %s227 = scalar_lea.sflag [#allocation6], %s226
        %s228 = sand.u32 %s85, 1
        %s229 = smul.addr %s228, 16
        %s230 = scalar_lea.vmem [#allocation5], %s229
        // Predicated region
        $region33: #{tpu_custom_call.1} parent=27 // pred_check
          %p231 = pneg %p98
        $region34: #{tpu_custom_call.1} parent=27 // pred_check_branch
          %233 = sbr.rel (%p231) target = $region36
        $region35: #{tpu_custom_call.1} parent=27 // pred_region
          %234 = dma.done %s227, 256
        $region36: #{tpu_custom_call.1} parent=27 // pred_fallthru
          _
        %s235 = sand.u32 %s55, 1
        %s236 = scalar_lea.sflag [#allocation3], %s235
        %s237 = sand.u32 %s55, 1
        %s238 = smul.addr %s237, 16
        %s239 = scalar_lea.vmem [#allocation2], %s238
        %p240 = pneg %p68
        %p241 = pneg %p65
        %s242 = sand.u32 %s85, 1
        %s243 = scalar_lea.sflag [#allocation6], %s242
        %s244 = sand.u32 %s85, 1
        %s245 = smul.addr %s244, 16
        %s246 = scalar_lea.vmem [#allocation5], %s245
        %p247 = pneg %p98
        %p248 = pneg %p95
        %p249 = pneg %p128
        %p250 = pneg %p125
        %s251 = sand.u32 %s115, 1
        %s252 = scalar_lea.sflag [#allocation4], %s251
        %s253 = sand.u32 %s115, 1
        %s254 = smul.addr %s253, 16
        %s255 = scalar_lea.vmem [#allocation7], %s254
        %s256 = ssub.s32 2, %s28
        %s257 = smul.u32 2, %s29
        %s258 = ssub.s32 3, %s257
        %p259 = scmp.lt.s32.totalorder %s258, 2
        %s260 = scalar_select %p259, %s258, 2
        %s261 = smul.u32 128, %s260
        %s262 = smul.u32 2, %s29
        %s263 = ssub.s32 3, %s262
        %p264 = scmp.lt.s32.totalorder %s263, 2
        %s265 = scalar_select %p264, %s263, 2
        %s266 = smul.u32 128, %s265
        %s267 = smul.u32 2, %s29
        %v268 = vld [vmem:[%s221] sm:$0xff]
        %v269 = vld [vmem:[%s221 + $0x8] sm:$0xff]
        %v270 = vld [vmem:[%s230] sm:$0xff]
        %v271 = vld [vmem:[%s230 + $0x8] sm:$0xff]
        %v272 = vmul.f32 %v270, 0.1
        %v273 = vmul.f32 %v271, 0.1
        %v274 = vadd.f32 %v268, %v272
        %v275 = vadd.f32 %v269, %v273
        %v276 = vmax.f32 %v274, 0.0
        %v277 = vmax.f32 %v275, 0.0
        %v278 = vmin.f32 %v276, 1.0
        %v279 = vmin.f32 %v277, 1.0
        %p280 = scmp.eq.s32.totalorder %s28, 0
        %p281 = scmp.eq.s32.totalorder %s28, 1
        %s282 = scalar_select %p281, 4.464286, 4.366812
        %s283 = scalar_select %p280, 4.4444447, %s282
        %s284 = scalar_select %p281, -2.0357144, -2.117904
        %s285 = scalar_select %p280, -1.8044444, %s284
        %v286 = vstv %s283
        %v287 = vmul.f32 %v278, %v286
        %v288 = vmul.f32 %v279, %v286
        %v289 = vstv %s285
        %v290 = vadd.f32 %v287, %v289
        %v291 = vadd.f32 %v288, %v289
        %vm292 = vcmask 326656
        %v293 = vsel %vm292, %v290, 0.0
        %v294 = vsel %vm292, %v291, 0.0
        %p295 = scmp.eq.s32.totalorder %s29, 1
        // Predicated region
        $region37: #{tpu_custom_call.1} parent=27 // pred_check
          %p296 = pneg %p295
        $region38: #{tpu_custom_call.1} parent=27 // pred_check_branch
          %298 = sbr.rel (%p296) target = $region40
        $region39: #{tpu_custom_call.1} parent=27 // pred_region
          %v299 = vlaneseq
          %v300 = vshrl.u32 %v299, 7
          %v301 = vadd.s32 %v300, 8
          %s302 = smul.u32 %s29, 16
          %v303 = vstv %s302
          %v304 = vadd.s32 %v300, %v303
          %v305 = vadd.s32 %v301, %v303
          %vm306 = vcmp.lt.s32.totalorder %v304, 24
          %vm307 = vcmp.lt.s32.totalorder %v305, 24
          %v308 = vsel %vm306, %v293, 0.0
          %v309 = vsel %vm307, %v294, 0.0
          %310 = vst [vmem:[%s255] sm:$0xff] %v308
          %311 = vst [vmem:[%s255 + $0x8] sm:$0xff] %v309
        $region40: #{tpu_custom_call.1} parent=27 // pred_fallthru
          _
        %p312 = scmp.ne.s32.totalorder %s29, 1
        // Predicated region
        $region41: #{tpu_custom_call.1} parent=27 // pred_check
          %p313 = pneg %p312
        $region42: #{tpu_custom_call.1} parent=27 // pred_check_branch
          %315 = sbr.rel (%p313) target = $region44
        $region43: #{tpu_custom_call.1} parent=27 // pred_region
          %316 = vst [vmem:[%s255] sm:$0xff] %v293
          %317 = vst [vmem:[%s255 + $0x8] sm:$0xff] %v294
        $region44: #{tpu_custom_call.1} parent=27 // pred_fallthru
          _
        %s318 = sand.u32 %s115, 1
        %s319 = scalar_lea.sflag [#allocation4], %s318
        %s320 = sand.u32 %s115, 1
        %s321 = smul.addr %s320, 16
        %s322 = scalar_lea.vmem [#allocation7], %s321
        // Predicated region
        $region45: #{tpu_custom_call.1} parent=27 // pred_check
          %p323 = pneg %p125
        $region46: #{tpu_custom_call.1} parent=27 // pred_check_branch
          %325 = sbr.rel (%p323) target = $region48
        $region47: #{tpu_custom_call.1} parent=27 // pred_region
          %s326 = smul.u32 2, %s29
          %s328 = ssub.s32 256, 256
          %329 = vsyncadd %s319, %s328
          %s330 = smul.addr %s28, 4
          %s331 = sadd.s32 %s326, %s330
          %s332 = smul.addr %s27, 12
          %s333 = sadd.s32 %s331, %s332
          %s334 = smul.addr %s333, 128
          %s335 = scalar_lea.hbm %s2, %s334
          %s336 = sshll.u32 %s322, 4
          %s337 = int_to_ptr.vmem [resolvable:$true] %s336
          %342 = dma.vmem_to_hbm [thread:$0]  %s337, 256, %s335, %s319, 128, 128, 8
        $region48: #{tpu_custom_call.1} parent=27 // pred_fallthru
          _
      $region28: #{tpu_custom_call.1} parent=5 // pred_fallthru
        _
      %p343 = scmp.le.s32.totalorder 2, %s17
      // Predicated region
      $region49: #{tpu_custom_call.1} parent=5 // pred_check
        %p344 = pneg %p343
      $region50: #{tpu_custom_call.1} parent=5 // pred_check_branch
        %346 = sbr.rel (%p344) target = $region52
      $region51: #{tpu_custom_call.1} parent=5 // pred_region
        %s347 = ssub.s32 %s17, 2
        // Predicated region
        $region53: #{tpu_custom_call.1} parent=51 // pred_check
          %p348 = pneg %p131
        $region54: #{tpu_custom_call.1} parent=51 // pred_check_branch
          %350 = sbr.rel (%p348) target = $region56
        $region55: #{tpu_custom_call.1} parent=51 // pred_region
          %s351 = sand.u32 %s116, 1
          %s352 = scalar_lea.sflag [#allocation4], %s351
          %s353 = sand.u32 %s116, 1
          %s354 = smul.addr %s353, 16
          %s355 = scalar_lea.vmem [#allocation7], %s354
          %356 = dma.done %s352, 256
        $region56: #{tpu_custom_call.1} parent=51 // pred_fallthru
          _
      $region52: #{tpu_custom_call.1} parent=5 // pred_fallthru
        _
    $region6: #{tpu_custom_call.1} parent=1 // loop_footer
      %s21 = sadd.s32 1, %s17
    $region7: #{tpu_custom_call.1} parent=1 // loop_footer_branch
      %16 = sbr.rel target = $region3
    $region8: #{tpu_custom_call.1} parent=1 // loop_exit
      _
    %357 = vsyncpa [#allocation3], 1
    %s358 = scalar_lea.sflag [#allocation3], 1
    %359 = vsyncpa %s358, 1
    %360 = vsyncpa [#allocation6], 1
    %s361 = scalar_lea.sflag [#allocation6], 1
    %362 = vsyncpa %s361, 1
    %363 = vsyncpa [#allocation4], 1
    %s364 = scalar_lea.sflag [#allocation4], 1
    %365 = vsyncpa %s364, 1

</llo_original>
